<compile_context>
chip_gen: v5e
topology: v5e:2x2
jax: 0.10.0
libtpu: 0.0.40
codegen_flags: <defaults>
</compile_context>

<pallas_src>
import jax
import jax.numpy as jnp
from jax import lax
from jax.experimental import pallas as pl
from jax.experimental.pallas import tpu as pltpu

BN_EPS = 1e-5


# ----------------------------------------------------------------------------
# Pallas kernel: whole Block forward, fully VMEM-resident, channels-last 2-D.
# ----------------------------------------------------------------------------
def block_kernel(x_ref, z_ref, film_w_ref, conv_w_ref, slab_ref, o_ref):
    B, C, L = x_ref.shape
    N = B * L

    slab = slab_ref[...]                          # (4, C): c1_b, c2_b, bn_g, bn_b

    # ---- all four FiLM affines (weights + biases) in a single MXU push ------
    # film_w is (F+1, 4C); its last row carries the Linear biases, picked up by
    # the constant-1 column appended to z.
    z1 = jnp.concatenate(
        [z_ref[...], jnp.ones((B, 1), jnp.float32)], axis=1)      # (B, F+1)
    zf = jnp.dot(z1, film_w_ref[...],
                 preferred_element_type=jnp.float32)              # (B, 4C)

    def expand(v):                                # (B, C) -> (B*L, C)
        return jnp.broadcast_to(v[:, None, :], (B, L, C)).reshape(N, C)

    s1 = expand(zf[:, 0 * C:1 * C])
    t1 = expand(zf[:, 1 * C:2 * C])
    s2 = expand(zf[:, 2 * C:3 * C])
    t2 = expand(zf[:, 3 * C:4 * C])

    # ---- NCL input -> channels-last 2-D activation (B*L, C), in-kernel ------
    h = jnp.transpose(x_ref[...], (0, 2, 1)).reshape(N, C)

    # ---- length-boundary masks, computed once and shared by both convs ------
    l_idx = lax.broadcasted_iota(jnp.int32, (B, L, C), 1).reshape(N, C)
    not_first = l_idx != 0           # l-1 in range
    not_last = l_idx != (L - 1)      # l+1 in range

    def conv_k3(a, w_packed, bias):
        # Fused k=3 conv: one MXU dot on the lane-concatenated taps.
        prev = jnp.where(not_first, pltpu.roll(a, shift=1, axis=0), 0.0)
        nxt = jnp.where(not_last, pltpu.roll(a, shift=N - 1, axis=0), 0.0)
        taps = jnp.concatenate([prev, a, nxt], axis=1)            # (N, 3C)
        return jnp.dot(taps, w_packed,
                       preferred_element_type=jnp.float32) + bias

    h = h * s1 + t1                                               # FiLM1
    h = jnp.maximum(conv_k3(h, conv_w_ref[0], slab[0:1, :]), 0.0)
    h = h * s2 + t2                                               # FiLM2
    y = conv_k3(h, conv_w_ref[1], slab[1:2, :])                   # (N, C)

    # ---- BatchNorm1d (training-mode batch stats, biased var) + final ReLU ---
    inv_n = 1.0 / float(N)
    mean = jnp.sum(y, axis=0, keepdims=True) * inv_n
    diff = y - mean
    var = jnp.sum(diff * diff, axis=0, keepdims=True) * inv_n
    out = jnp.maximum(diff * lax.rsqrt(var + BN_EPS) * slab[2:3, :]
                      + slab[3:4, :], 0.0)                        # (N, C)
    # TODO(synk): BatchNorm running_mean/running_var buffer updates (training
    # side effect) are not produced; only the forward output is computed.

    # ---- back to NCL inside the kernel (no wrapper-side transpose) ----------
    o_ref[...] = jnp.transpose(out.reshape(B, L, C), (0, 2, 1))


# ----------------------------------------------------------------------------
# One-time parameter packing (outside the per-call hot path).
# ----------------------------------------------------------------------------
def pack_block_params(p):
    f = lambda a: jnp.asarray(a, jnp.float32)
    # FiLM affine slab (F+1, 4C): columns [scale1 | shift1 | scale2 | shift2],
    # last row = Linear biases (consumed via the in-kernel ones-column on z).
    w = jnp.concatenate([f(p["f1s_w"]).T, f(p["f1h_w"]).T,
                         f(p["f2s_w"]).T, f(p["f2h_w"]).T], axis=1)      # (F, 4C)
    b = jnp.concatenate([f(p["f1s_b"]), f(p["f1h_b"]),
                         f(p["f2s_b"]), f(p["f2h_b"])])[None, :]          # (1, 4C)
    film_w = jnp.concatenate([w, b], axis=0)                              # (F+1, 4C)

    def conv_pack(cw):  # PyTorch (Cout, Cin, 3) -> (3*Cin, Cout), tap-major rows
        cw = f(cw)
        return jnp.transpose(cw, (2, 1, 0)).reshape(3 * cw.shape[1], cw.shape[0])

    conv_w = jnp.stack([conv_pack(p["c1_w"]), conv_pack(p["c2_w"])], axis=0)  # (2, 3C, C)
    slab = jnp.stack([f(p["c1_b"]), f(p["c2_b"]),
                      f(p["bn_g"]), f(p["bn_b"])], axis=0)                     # (4, C)
    return film_w, conv_w, slab


# ----------------------------------------------------------------------------
# Wrapper: single gridless pallas_call, everything VMEM-resident, no transposes.
# ----------------------------------------------------------------------------
def block_forward(x_ncl, z, packed):
    film_w, conv_w, slab = packed
    B, C, L = x_ncl.shape
    vspec = pl.BlockSpec(memory_space=pltpu.MemorySpace.VMEM)
    return pl.pallas_call(
        block_kernel,
        out_shape=jax.ShapeDtypeStruct((B, C, L), jnp.float32),
        in_specs=[vspec] * 5,
        out_specs=vspec,
    )(jnp.asarray(x_ncl, jnp.float32), jnp.asarray(z, jnp.float32),
      film_w, conv_w, slab)


# ----------------------------------------------------------------------------
# Pure-JAX reference (mirrors the PyTorch code in NCL layout).
# ----------------------------------------------------------------------------
def _conv1d_ref(x, w, b):
    L = x.shape[-1]
    xp = jnp.pad(x, ((0, 0), (0, 0), (1, 1)))
    y = sum(jnp.einsum("bil,oi->bol", xp[:, :, k:k + L], w[:, :, k]) for k in range(3))
    return y + b[None, :, None]


def block_ref(x, z, p):
    s = z @ p["f1s_w"].T + p["f1s_b"]
    t = z @ p["f1h_w"].T + p["f1h_b"]
    h = x * s[:, :, None] + t[:, :, None]
    h = jnp.maximum(_conv1d_ref(h, p["c1_w"], p["c1_b"]), 0.0)
    s = z @ p["f2s_w"].T + p["f2s_b"]
    t = z @ p["f2h_w"].T + p["f2h_b"]
    h = h * s[:, :, None] + t[:, :, None]
    y = _conv1d_ref(h, p["c2_w"], p["c2_b"])
    mean = jnp.mean(y, axis=(0, 2), keepdims=True)
    var = jnp.mean((y - mean) ** 2, axis=(0, 2), keepdims=True)
    yn = (y - mean) * lax.rsqrt(var + BN_EPS)
    yn = yn * p["bn_g"][None, :, None] + p["bn_b"][None, :, None]
    return jnp.maximum(yn, 0.0)


if __name__ == "__main__":
    # Small shapes consistent with the module (use_film=True):
    # inputs = middles = outs = 8, film_dim = 4, batch = 2, length = 16.
    B, C, L, F = 2, 8, 16, 4
    key = jax.random.PRNGKey(0)
    ks = jax.random.split(key, 12)

    params = {
        "f1s_w": 0.2 * jax.random.normal(ks[0], (C, F), jnp.float32),
        "f1s_b": 0.1 * jax.random.normal(ks[1], (C,), jnp.float32) + 1.0,
        "f1h_w": 0.2 * jax.random.normal(ks[2], (C, F), jnp.float32),
        "f1h_b": 0.1 * jax.random.normal(ks[3], (C,), jnp.float32),
        "c1_w": 0.3 * jax.random.normal(ks[4], (C, C, 3), jnp.float32),
        "c1_b": 0.1 * jax.random.normal(ks[5], (C,), jnp.float32),
        "f2s_w": 0.2 * jax.random.normal(ks[6], (C, F), jnp.float32),
        "f2s_b": 0.1 * jax.random.normal(ks[7], (C,), jnp.float32) + 1.0,
        "f2h_w": 0.2 * jax.random.normal(ks[8], (C, F), jnp.float32),
        "f2h_b": 0.1 * jax.random.normal(ks[9], (C,), jnp.float32),
        "c2_w": 0.3 * jax.random.normal(ks[10], (C, C, 3), jnp.float32),
        "c2_b": 0.1 * jax.random.normal(ks[11], (C,), jnp.float32),
        "bn_g": jnp.ones((C,), jnp.float32),
        "bn_b": jnp.zeros((C,), jnp.float32),
    }

    kx, kz = jax.random.split(jax.random.PRNGKey(42))
    x = jax.random.normal(kx, (B, C, L), jnp.float32)        # NCL, like PyTorch
    z = jax.random.normal(kz, (B, F), jnp.float32)           # film_params

    packed = pack_block_params(params)                        # one-time repack
    out = jax.block_until_ready(block_forward(x, z, packed))
    ref = block_ref(x, z, params)

    assert out.shape == (B, C, L)
    assert bool(jnp.allclose(out, ref, rtol=1e-4, atol=1e-4)), "mismatch vs reference"
    print("KERNEL_OK")
</pallas_src>

<mosaic_0001>
module attributes {stable_mosaic.version = 11 : i64} {
  func.func @block_kernel(%arg0: memref<2x8x16xf32, #tpu.memory_space<vmem>>, %arg1: memref<2x4xf32, #tpu.memory_space<vmem>>, %arg2: memref<5x32xf32, #tpu.memory_space<vmem>>, %arg3: memref<2x24x8xf32, #tpu.memory_space<vmem>>, %arg4: memref<4x8xf32, #tpu.memory_space<vmem>>, %arg5: memref<2x8x16xf32, #tpu.memory_space<vmem>>) attributes {dimension_semantics = [], scalar_prefetch = 0 : i64, scratch_operands = 0 : i64, tpu.core_type = #tpu.core_type<tc>} {
    %c0 = arith.constant 0 : index
    %c0_0 = arith.constant 0 : index
    %0 = vector.load %arg4[%c0, %c0_0] : memref<4x8xf32, #tpu.memory_space<vmem>>, vector<4x8xf32>
    %c0_1 = arith.constant 0 : index
    %c0_2 = arith.constant 0 : index
    %1 = vector.load %arg1[%c0_1, %c0_2] : memref<2x4xf32, #tpu.memory_space<vmem>>, vector<2x4xf32>
    %cst = arith.constant 1.000000e+00 : f32
    %2 = vector.broadcast %cst : f32 to vector<2x1xf32>
    %3 = tpu.concatenate %1, %2 in 1 : vector<2x4xf32>, vector<2x1xf32> -> vector<2x5xf32>
    %c0_3 = arith.constant 0 : index
    %c0_4 = arith.constant 0 : index
    %4 = vector.load %arg2[%c0_3, %c0_4] : memref<5x32xf32, #tpu.memory_space<vmem>>, vector<5x32xf32>
    %cst_5 = arith.constant dense<0.000000e+00> : vector<2x32xf32>
    %5 = tpu.matmul %3, %4, %cst_5 {dimension_numbers = #tpu.dot_dimension_numbers<[1], [0], [0], [1], [0, 0, 1, 1], [], []>} : vector<2x5xf32>, vector<5x32xf32>, vector<2x32xf32> -> vector<2x32xf32>
    %6 = vector.extract_strided_slice %5 {offsets = [0, 0], sizes = [2, 8], strides = [1, 1]} : vector<2x32xf32> to vector<2x8xf32>
    %7 = vector.shape_cast %6 : vector<2x8xf32> to vector<2x1x8xf32>
    %8 = vector.shape_cast %7 : vector<2x1x8xf32> to vector<2x1x8xf32>
    %9 = vector.broadcast %8 : vector<2x1x8xf32> to vector<2x16x8xf32>
    %10 = vector.shape_cast %9 : vector<2x16x8xf32> to vector<32x8xf32>
    %11 = vector.extract_strided_slice %5 {offsets = [0, 8], sizes = [2, 8], strides = [1, 1]} : vector<2x32xf32> to vector<2x8xf32>
    %12 = vector.shape_cast %11 : vector<2x8xf32> to vector<2x1x8xf32>
    %13 = vector.shape_cast %12 : vector<2x1x8xf32> to vector<2x1x8xf32>
    %14 = vector.broadcast %13 : vector<2x1x8xf32> to vector<2x16x8xf32>
    %15 = vector.shape_cast %14 : vector<2x16x8xf32> to vector<32x8xf32>
    %16 = vector.extract_strided_slice %5 {offsets = [0, 16], sizes = [2, 8], strides = [1, 1]} : vector<2x32xf32> to vector<2x8xf32>
    %17 = vector.shape_cast %16 : vector<2x8xf32> to vector<2x1x8xf32>
    %18 = vector.shape_cast %17 : vector<2x1x8xf32> to vector<2x1x8xf32>
    %19 = vector.broadcast %18 : vector<2x1x8xf32> to vector<2x16x8xf32>
    %20 = vector.shape_cast %19 : vector<2x16x8xf32> to vector<32x8xf32>
    %21 = vector.extract_strided_slice %5 {offsets = [0, 24], sizes = [2, 8], strides = [1, 1]} : vector<2x32xf32> to vector<2x8xf32>
    %22 = vector.shape_cast %21 : vector<2x8xf32> to vector<2x1x8xf32>
    %23 = vector.shape_cast %22 : vector<2x1x8xf32> to vector<2x1x8xf32>
    %24 = vector.broadcast %23 : vector<2x1x8xf32> to vector<2x16x8xf32>
    %25 = vector.shape_cast %24 : vector<2x16x8xf32> to vector<32x8xf32>
    %c0_6 = arith.constant 0 : index
    %c0_7 = arith.constant 0 : index
    %c0_8 = arith.constant 0 : index
    %26 = vector.load %arg0[%c0_6, %c0_7, %c0_8] : memref<2x8x16xf32, #tpu.memory_space<vmem>>, vector<2x8x16xf32>
    %27 = tpu.transpose %26, [0, 2, 1] : vector<2x8x16xf32> -> vector<2x16x8xf32>
    %28 = vector.shape_cast %27 : vector<2x16x8xf32> to vector<32x8xf32>
    %29 = tpu.iota {dimensions = array<i32: 1>} : vector<2x16x8xi32>
    %30 = vector.shape_cast %29 : vector<2x16x8xi32> to vector<32x8xi32>
    %c0_i32 = arith.constant 0 : i32
    %31 = vector.broadcast %c0_i32 : i32 to vector<32x8xi32>
    %32 = arith.cmpi ne, %30, %31 : vector<32x8xi32>
    %c15_i32 = arith.constant 15 : i32
    %33 = vector.broadcast %c15_i32 : i32 to vector<32x8xi32>
    %34 = arith.cmpi ne, %30, %33 : vector<32x8xi32>
    %35 = arith.mulf %28, %10 : vector<32x8xf32>
    %36 = arith.addf %35, %15 : vector<32x8xf32>
    %c0_9 = arith.constant 0 : index
    %c0_10 = arith.constant 0 : index
    %c0_11 = arith.constant 0 : index
    %37 = vector.load %arg3[%c0_9, %c0_10, %c0_11] : memref<2x24x8xf32, #tpu.memory_space<vmem>>, vector<1x24x8xf32>
    %38 = vector.shape_cast %37 : vector<1x24x8xf32> to vector<24x8xf32>
    %39 = vector.extract_strided_slice %0 {offsets = [0, 0], sizes = [1, 8], strides = [1, 1]} : vector<4x8xf32> to vector<1x8xf32>
    %c1_i32 = arith.constant 1 : i32
    %40 = tpu.dynamic_rotate %36 by %c1_i32 dim 0 : vector<32x8xf32>, i32 -> vector<32x8xf32>
    %cst_12 = arith.constant 0.000000e+00 : f32
    %41 = vector.broadcast %cst_12 : f32 to vector<32x8xf32>
    %42 = arith.select %32, %40, %41 : vector<32x8xi1>, vector<32x8xf32>
    %c31_i32 = arith.constant 31 : i32
    %43 = tpu.dynamic_rotate %36 by %c31_i32 dim 0 : vector<32x8xf32>, i32 -> vector<32x8xf32>
    %cst_13 = arith.constant 0.000000e+00 : f32
    %44 = vector.broadcast %cst_13 : f32 to vector<32x8xf32>
    %45 = arith.select %34, %43, %44 : vector<32x8xi1>, vector<32x8xf32>
    %46 = tpu.concatenate %42, %36, %45 in 1 : vector<32x8xf32>, vector<32x8xf32>, vector<32x8xf32> -> vector<32x24xf32>
    %cst_14 = arith.constant dense<0.000000e+00> : vector<32x8xf32>
    %47 = tpu.matmul %46, %38, %cst_14 {dimension_numbers = #tpu.dot_dimension_numbers<[1], [0], [0], [1], [0, 0, 1, 1], [], []>} : vector<32x24xf32>, vector<24x8xf32>, vector<32x8xf32> -> vector<32x8xf32>
    %48 = vector.broadcast %39 : vector<1x8xf32> to vector<32x8xf32>
    %49 = arith.addf %47, %48 : vector<32x8xf32>
    %cst_15 = arith.constant 0.000000e+00 : f32
    %50 = vector.broadcast %cst_15 : f32 to vector<32x8xf32>
    %51 = arith.maximumf %49, %50 : vector<32x8xf32>
    %52 = arith.mulf %51, %20 : vector<32x8xf32>
    %53 = arith.addf %52, %25 : vector<32x8xf32>
    %c1 = arith.constant 1 : index
    %c0_16 = arith.constant 0 : index
    %c0_17 = arith.constant 0 : index
    %54 = vector.load %arg3[%c1, %c0_16, %c0_17] : memref<2x24x8xf32, #tpu.memory_space<vmem>>, vector<1x24x8xf32>
    %55 = vector.shape_cast %54 : vector<1x24x8xf32> to vector<24x8xf32>
    %56 = vector.extract_strided_slice %0 {offsets = [1, 0], sizes = [1, 8], strides = [1, 1]} : vector<4x8xf32> to vector<1x8xf32>
    %c1_i32_18 = arith.constant 1 : i32
    %57 = tpu.dynamic_rotate %53 by %c1_i32_18 dim 0 : vector<32x8xf32>, i32 -> vector<32x8xf32>
    %cst_19 = arith.constant 0.000000e+00 : f32
    %58 = vector.broadcast %cst_19 : f32 to vector<32x8xf32>
    %59 = arith.select %32, %57, %58 : vector<32x8xi1>, vector<32x8xf32>
    %c31_i32_20 = arith.constant 31 : i32
    %60 = tpu.dynamic_rotate %53 by %c31_i32_20 dim 0 : vector<32x8xf32>, i32 -> vector<32x8xf32>
    %cst_21 = arith.constant 0.000000e+00 : f32
    %61 = vector.broadcast %cst_21 : f32 to vector<32x8xf32>
    %62 = arith.select %34, %60, %61 : vector<32x8xi1>, vector<32x8xf32>
    %63 = tpu.concatenate %59, %53, %62 in 1 : vector<32x8xf32>, vector<32x8xf32>, vector<32x8xf32> -> vector<32x24xf32>
    %cst_22 = arith.constant dense<0.000000e+00> : vector<32x8xf32>
    %64 = tpu.matmul %63, %55, %cst_22 {dimension_numbers = #tpu.dot_dimension_numbers<[1], [0], [0], [1], [0, 0, 1, 1], [], []>} : vector<32x24xf32>, vector<24x8xf32>, vector<32x8xf32> -> vector<32x8xf32>
    %65 = vector.broadcast %56 : vector<1x8xf32> to vector<32x8xf32>
    %66 = arith.addf %64, %65 : vector<32x8xf32>
    %cst_23 = arith.constant dense<0.000000e+00> : vector<8xf32>
    %67 = vector.multi_reduction <add>, %66, %cst_23 [0] : vector<32x8xf32> to vector<8xf32>
    %68 = vector.shape_cast %67 : vector<8xf32> to vector<1x8xf32>
    %cst_24 = arith.constant 3.125000e-02 : f32
    %69 = vector.broadcast %cst_24 : f32 to vector<1x8xf32>
    %70 = arith.mulf %68, %69 : vector<1x8xf32>
    %71 = vector.broadcast %70 : vector<1x8xf32> to vector<32x8xf32>
    %72 = arith.subf %66, %71 : vector<32x8xf32>
    %73 = arith.mulf %72, %72 : vector<32x8xf32>
    %cst_25 = arith.constant dense<0.000000e+00> : vector<8xf32>
    %74 = vector.multi_reduction <add>, %73, %cst_25 [0] : vector<32x8xf32> to vector<8xf32>
    %75 = vector.shape_cast %74 : vector<8xf32> to vector<1x8xf32>
    %cst_26 = arith.constant 3.125000e-02 : f32
    %76 = vector.broadcast %cst_26 : f32 to vector<1x8xf32>
    %77 = arith.mulf %75, %76 : vector<1x8xf32>
    %cst_27 = arith.constant 9.99999974E-6 : f32
    %78 = vector.broadcast %cst_27 : f32 to vector<1x8xf32>
    %79 = arith.addf %77, %78 : vector<1x8xf32>
    %80 = math.rsqrt %79 : vector<1x8xf32>
    %81 = vector.broadcast %80 : vector<1x8xf32> to vector<32x8xf32>
    %82 = arith.mulf %72, %81 : vector<32x8xf32>
    %83 = vector.extract_strided_slice %0 {offsets = [2, 0], sizes = [1, 8], strides = [1, 1]} : vector<4x8xf32> to vector<1x8xf32>
    %84 = vector.broadcast %83 : vector<1x8xf32> to vector<32x8xf32>
    %85 = arith.mulf %82, %84 : vector<32x8xf32>
    %86 = vector.extract_strided_slice %0 {offsets = [3, 0], sizes = [1, 8], strides = [1, 1]} : vector<4x8xf32> to vector<1x8xf32>
    %87 = vector.broadcast %86 : vector<1x8xf32> to vector<32x8xf32>
    %88 = arith.addf %85, %87 : vector<32x8xf32>
    %cst_28 = arith.constant 0.000000e+00 : f32
    %89 = vector.broadcast %cst_28 : f32 to vector<32x8xf32>
    %90 = arith.maximumf %88, %89 : vector<32x8xf32>
    %91 = vector.shape_cast %90 : vector<32x8xf32> to vector<2x16x8xf32>
    %92 = tpu.transpose %91, [0, 2, 1] : vector<2x16x8xf32> -> vector<2x8x16xf32>
    %c0_29 = arith.constant 0 : index
    %c0_30 = arith.constant 0 : index
    %c0_31 = arith.constant 0 : index
    %93 = vector.load %arg5[%c0_29, %c0_30, %c0_31] : memref<2x8x16xf32, #tpu.memory_space<vmem>>, vector<2x8x16xf32>
    tpu.vector_store %arg5[%c0_29, %c0_30, %c0_31], %92 {strides = array<i32>} : memref<2x8x16xf32, #tpu.memory_space<vmem>>, vector<2x8x16xf32>,
    return
  }
}

</mosaic_0001>

<llo_original>
// kernel: tpu_custom_call.1
$region0: #{tpu_custom_call.1}
  #allocation0 [shape = 'u32[]', space=smem, size = 0x4, offset = 0x4, fixed_abs, tag = 'smem constant byte address 0x4 - core index']
  #allocation1 [shape = 'u32[72,128]{1,0:T(1,128)}', space=vmem, size = 0x9000, scoped, tag = 'internal scratch']
  %s0 = inlined_call_operand.vmem [shape: f32[2,8,16], index: 0, kind: input, shape index: {}]
  %s1 = inlined_call_operand.vmem [shape: f32[2,4], index: 1, kind: input, shape index: {}]
  %s2 = inlined_call_operand.vmem [shape: f32[5,32], index: 2, kind: input, shape index: {}]
  %s3 = inlined_call_operand.vmem [shape: f32[2,24,8], index: 3, kind: input, shape index: {}]
  %s4 = inlined_call_operand.vmem [shape: f32[4,8], index: 4, kind: input, shape index: {}]
  %s5 = inlined_call_operand.hbm [shape: f32[2,8,16], index: 5, kind: output, shape index: {}]
  %s6 = sld [smem:[#allocation0]]
  $region30: #{tpu_custom_call.1} parent=0
    _
  %s8 = ssub.s32 1, %s6
  %s9 = scalar_select 0, %s8, %s6
  $region1: #{tpu_custom_call.1} parent=0
    #allocation2 [shape = 'u8[8192]{0}', space=vmem, size = 0x2000, scoped, tag = 'output window, operand 0, single buffered']
    #allocation3 [shape = 's32[1]{0}', space=sflag, size = 0x4, scoped, tag = 'scoped memory for tpu_custom_call.1']
    %10 = vsyncpa [#allocation3], 0
    // Predicated region
    $region2: #{tpu_custom_call.1} parent=1 // pred_check
      _
    $region3: #{tpu_custom_call.1} parent=1 // pred_check_branch
      %12 = sbr.rel (0) target = $region5
    $region4: #{tpu_custom_call.1} parent=1 // pred_region
      _
    $region5: #{tpu_custom_call.1} parent=1 // pred_fallthru
      _
    // Predicated region
    $region6: #{tpu_custom_call.1} parent=1 // pred_check
      _
    $region7: #{tpu_custom_call.1} parent=1 // pred_check_branch
      %14 = sbr.rel (0) target = $region9
    $region8: #{tpu_custom_call.1} parent=1 // pred_region
      _
    $region9: #{tpu_custom_call.1} parent=1 // pred_fallthru
      _
    // Predicated region
    $region10: #{tpu_custom_call.1} parent=1 // pred_check
      _
    $region11: #{tpu_custom_call.1} parent=1 // pred_check_branch
      %16 = sbr.rel (0) target = $region13
    $region12: #{tpu_custom_call.1} parent=1 // pred_region
      _
    $region13: #{tpu_custom_call.1} parent=1 // pred_fallthru
      _
    // Predicated region
    $region14: #{tpu_custom_call.1} parent=1 // pred_check
      _
    $region15: #{tpu_custom_call.1} parent=1 // pred_check_branch
      %18 = sbr.rel (0) target = $region17
    $region16: #{tpu_custom_call.1} parent=1 // pred_region
      _
    $region17: #{tpu_custom_call.1} parent=1 // pred_fallthru
      _
    // Predicated region
    $region18: #{tpu_custom_call.1} parent=1 // pred_check
      _
    $region19: #{tpu_custom_call.1} parent=1 // pred_check_branch
      %20 = sbr.rel (0) target = $region21
    $region20: #{tpu_custom_call.1} parent=1 // pred_region
      _
    $region21: #{tpu_custom_call.1} parent=1 // pred_fallthru
      _
    %v21 = vld [vmem:[%s4] sm:$0xf]
    %v22 = vld [vmem:[%s1] sm:$0x3]
    %vm23 = vcmask 31744
    %v24 = vsel %vm23, %v22, 1.0
    %v25 = vld [vmem:[%s2] sm:$0x1f]
    %vm26 = vcmask 39936
    %v28 = vsel %vm26, %v24, 0
    %vm30 = vcmask 1044480
    %v32 = vsel %vm30, %v25, 0
    %34 = vmatpush.msra.mxu0 0.0
    %35 = vmatpush.msra.mxu0 0.0
    %36 = vmatpush.msra.mxu0 0.0
    %37 = vmatpush.msra.mxu0 0.0
    %38 = vmatpush.msra.mxu0 0.0
    %39 = vmatpush.msra.mxu0 0.0
    %40 = vmatpush.msra.mxu0 0.0
    %41 = vmatpush.msra.mxu0 0.0
    %42 = vmatpush.msra.mxu0 0.0
    %43 = vmatpush.msra.mxu0 0.0
    %44 = vmatpush.msra.mxu0 0.0
    %45 = vmatpush.msra.mxu0 0.0
    %46 = vmatpush.msra.mxu0 0.0
    %47 = vmatpush.msra.mxu0 0.0
    %48 = vmatpush.msra.mxu0 0.0
    %49 = vmatpush.msra.mxu0 %v32
    %50 = vmatmul.f32.gmra.mxu0 %v28
    %v51 = vpop.f32.mrf.mxu0
    %v52 = vadd.f32 0.0, %v51
    %53 = vdwg.mxu0
    %v55 = vrot.slane %v52, 1
    %v56 = vperm.slane %v52, 0
    %v57 = vperm.slane %v55, 0
    %v60 = vld [vmem:[%s0] sm:$0xff]
    %v61 = vld [vmem:[%s0 + $0x8] sm:$0xff]
    %62 = vxpose.xlu0.b32.start [1/16] %v60, 128
    %63 = vxpose.xlu0.b32.cont [2/16] 0.0, 128
    %64 = vxpose.xlu0.b32.cont [3/16] 0.0, 128
    %65 = vxpose.xlu0.b32.cont [4/16] 0.0, 128
    %66 = vxpose.xlu0.b32.cont [5/16] 0.0, 128
    %67 = vxpose.xlu0.b32.cont [6/16] 0.0, 128
    %68 = vxpose.xlu0.b32.cont [7/16] 0.0, 128
    %69 = vxpose.xlu0.b32.cont [8/16] 0.0, 128
    %70 = vxpose.xlu0.b32.cont [9/16] 0.0, 128
    %71 = vxpose.xlu0.b32.cont [10/16] 0.0, 128
    %72 = vxpose.xlu0.b32.cont [11/16] 0.0, 128
    %73 = vxpose.xlu0.b32.cont [12/16] 0.0, 128
    %74 = vxpose.xlu0.b32.cont [13/16] 0.0, 128
    %75 = vxpose.xlu0.b32.cont [14/16] 0.0, 128
    %76 = vxpose.xlu0.b32.cont [15/16] 0.0, 128
    %77 = vxpose.xlu0.b32.end [16/16] 0.0, 128
    %v78 = vpop.trf.xlu0
    %v79 = vpop.trf.xlu0
    %v80 = vpop.trf.xlu0
    %v81 = vpop.trf.xlu0
    %v82 = vpop.trf.xlu0
    %v83 = vpop.trf.xlu0
    %v84 = vpop.trf.xlu0
    %v85 = vpop.trf.xlu0
    %v86 = vpop.trf.xlu0
    %v87 = vpop.trf.xlu0
    %v88 = vpop.trf.xlu0
    %v89 = vpop.trf.xlu0
    %v90 = vpop.trf.xlu0
    %v91 = vpop.trf.xlu0
    %v92 = vpop.trf.xlu0
    %v93 = vpop.trf.xlu0
    %94 = vxpose.xlu0.b32.start [1/16] %v61, 128
    %95 = vxpose.xlu0.b32.cont [2/16] 0.0, 128
    %96 = vxpose.xlu0.b32.cont [3/16] 0.0, 128
    %97 = vxpose.xlu0.b32.cont [4/16] 0.0, 128
    %98 = vxpose.xlu0.b32.cont [5/16] 0.0, 128
    %99 = vxpose.xlu0.b32.cont [6/16] 0.0, 128
    %100 = vxpose.xlu0.b32.cont [7/16] 0.0, 128
    %101 = vxpose.xlu0.b32.cont [8/16] 0.0, 128
    %102 = vxpose.xlu0.b32.cont [9/16] 0.0, 128
    %103 = vxpose.xlu0.b32.cont [10/16] 0.0, 128
    %104 = vxpose.xlu0.b32.cont [11/16] 0.0, 128
    %105 = vxpose.xlu0.b32.cont [12/16] 0.0, 128
    %106 = vxpose.xlu0.b32.cont [13/16] 0.0, 128
    %107 = vxpose.xlu0.b32.cont [14/16] 0.0, 128
    %108 = vxpose.xlu0.b32.cont [15/16] 0.0, 128
    %109 = vxpose.xlu0.b32.end [16/16] 0.0, 128
    %v110 = vpop.trf.xlu0
    %v111 = vpop.trf.xlu0
    %v112 = vpop.trf.xlu0
    %v113 = vpop.trf.xlu0
    %v114 = vpop.trf.xlu0
    %v115 = vpop.trf.xlu0
    %v116 = vpop.trf.xlu0
    %v117 = vpop.trf.xlu0
    %v118 = vpop.trf.xlu0
    %v119 = vpop.trf.xlu0
    %v120 = vpop.trf.xlu0
    %v121 = vpop.trf.xlu0
    %v122 = vpop.trf.xlu0
    %v123 = vpop.trf.xlu0
    %v124 = vpop.trf.xlu0
    %v125 = vpop.trf.xlu0
    %v126 = vlaneseq
    %v127 = vshrl.u32 %v126, 7
    %v128 = vadd.s32 %v127, 8
    %vm129 = vcmp.ne.s32.totalorder %v127, 0
    %vm130 = vcmp.ne.s32.totalorder %v128, 0
    %vm131 = vcmp.ne.s32.totalorder %v127, 15
    %vm132 = vcmp.ne.s32.totalorder %v128, 15
    %v133 = vmul.f32 %v78, %v56
    %v134 = vmul.f32 %v79, %v56
    %v135 = vmul.f32 %v110, %v57
    %v136 = vmul.f32 %v111, %v57
    %137 = vrot.lane.b32.xlu0 %v56, 120
    %v138 = vpop.permute.xlu0 %137
    %139 = vrot.lane.b32.xlu0 %v57, 120
    %v140 = vpop.permute.xlu0 %139
    %v143 = vadd.f32 %v133, %v138
    %v144 = vadd.f32 %v134, %v138
    %v145 = vadd.f32 %v135, %v140
    %v146 = vadd.f32 %v136, %v140
    %v147 = vld [vmem:[%s3] sm:$0xff]
    %v148 = vld [vmem:[%s3 + $0x8] sm:$0xff]
    %v149 = vld [vmem:[%s3 + $0x10] sm:$0xff]
    %v150 = vrot.slane %v143, 7
    %v151 = vrot.slane %v144, 7
    %v152 = vrot.slane %v145, 7
    %v153 = vrot.slane %v146, 7
    %vm154 = vcmp.lt.s32.totalorder %v127, 1
    %v155 = vsel %vm154, %v152, %v153
    %v156 = vsel %vm154, %v151, %v152
    %v157 = vsel %vm154, %v150, %v151
    %v158 = vsel %vm154, %v153, %v150
    %v159 = vsel %vm129, %v158, 0.0
    %v160 = vsel %vm130, %v157, 0.0
    %v161 = vsel %vm129, %v156, 0.0
    %v162 = vsel %vm130, %v155, 0.0
    %v163 = vrot.slane %v143, 1
    %v164 = vrot.slane %v144, 1
    %v165 = vrot.slane %v145, 1
    %v166 = vrot.slane %v146, 1
    %vm167 = vcmp.lt.s32.totalorder %v127, 7
    %v168 = vsel %vm167, %v165, %v166
    %v169 = vsel %vm167, %v164, %v165
    %v170 = vsel %vm167, %v163, %v164
    %v171 = vsel %vm167, %v166, %v163
    %v172 = vsel %vm131, %v170, 0.0
    %v173 = vsel %vm132, %v169, 0.0
    %v174 = vsel %vm131, %v168, 0.0
    %v175 = vsel %vm132, %v171, 0.0
    %180 = vrot.lane.b32.xlu0 %v143, 8
    %v181 = vpop.permute.xlu0 %180
    %182 = vrot.lane.b32.xlu0 %v144, 8
    %v183 = vpop.permute.xlu0 %182
    %184 = vrot.lane.b32.xlu0 %v145, 8
    %v185 = vpop.permute.xlu0 %184
    %186 = vrot.lane.b32.xlu0 %v146, 8
    %v187 = vpop.permute.xlu0 %186
    %196 = vrot.lane.b32.xlu0 %v172, 16
    %v197 = vpop.permute.xlu0 %196
    %198 = vrot.lane.b32.xlu0 %v173, 16
    %v199 = vpop.permute.xlu0 %198
    %200 = vrot.lane.b32.xlu0 %v174, 16
    %v201 = vpop.permute.xlu0 %200
    %202 = vrot.lane.b32.xlu0 %v175, 16
    %v203 = vpop.permute.xlu0 %202
    %vm208 = vcmask 64512
    %v209 = vsel %vm208, %v159, %v181
    %v210 = vsel %vm208, %v160, %v183
    %v211 = vsel %vm208, %v161, %v185
    %v212 = vsel %vm208, %v162, %v187
    %vm213 = vcmask 130048
    %v214 = vsel %vm213, %v209, %v197
    %v215 = vsel %vm213, %v210, %v199
    %v216 = vsel %vm213, %v211, %v201
    %v217 = vsel %vm213, %v212, %v203
    %v218 = vperm.slane %v21, 0
    %vm219 = vcmask 195584
    %v221 = vsel %vm219, %v214, 0
    %v224 = vsel %vm219, %v215, 0
    %v227 = vsel %vm219, %v216, 0
    %v230 = vsel %vm219, %v217, 0
    %232 = vmatpush.msra.mxu0 0.0
    %233 = vmatpush.msra.mxu0 0.0
    %234 = vmatpush.msra.mxu0 0.0
    %235 = vmatpush.msra.mxu0 0.0
    %236 = vmatpush.msra.mxu0 0.0
    %237 = vmatpush.msra.mxu0 0.0
    %238 = vmatpush.msra.mxu0 0.0
    %239 = vmatpush.msra.mxu0 0.0
    %240 = vmatpush.msra.mxu0 0.0
    %241 = vmatpush.msra.mxu0 0.0
    %242 = vmatpush.msra.mxu0 0.0
    %243 = vmatpush.msra.mxu0 0.0
    %244 = vmatpush.msra.mxu0 0.0
    %245 = vmatpush.msra.mxu0 %v149
    %246 = vmatpush.msra.mxu0 %v148
    %247 = vmatpush.msra.mxu0 %v147
    %248 = vmatmul.f32.gmra.mxu0 %v221
    %v249 = vpop.f32.mrf.mxu0
    %v250 = vadd.f32 %v218, %v249
    %251 = vmatmul.f32.gmra.mxu0 %v224
    %v252 = vpop.f32.mrf.mxu0
    %v253 = vadd.f32 %v218, %v252
    %254 = vmatmul.f32.gmra.mxu0 %v227
    %v255 = vpop.f32.mrf.mxu0
    %v256 = vadd.f32 %v218, %v255
    %257 = vmatmul.f32.gmra.mxu0 %v230
    %v258 = vpop.f32.mrf.mxu0
    %v259 = vadd.f32 %v218, %v258
    %260 = vdwg.mxu0
    %v261 = vmax.f32 %v250, 0.0
    %v262 = vmax.f32 %v253, 0.0
    %v263 = vmax.f32 %v256, 0.0
    %v264 = vmax.f32 %v259, 0.0
    %265 = vrot.lane.b32.xlu0 %v56, 112
    %v266 = vpop.permute.xlu0 %265
    %267 = vrot.lane.b32.xlu0 %v57, 112
    %v268 = vpop.permute.xlu0 %267
    %v271 = vmul.f32 %v261, %v266
    %v272 = vmul.f32 %v262, %v266
    %v273 = vmul.f32 %v263, %v268
    %v274 = vmul.f32 %v264, %v268
    %275 = vrot.lane.b32.xlu0 %v56, 104
    %v276 = vpop.permute.xlu0 %275
    %277 = vrot.lane.b32.xlu0 %v57, 104
    %v278 = vpop.permute.xlu0 %277
    %v281 = vadd.f32 %v271, %v276
    %v282 = vadd.f32 %v272, %v276
    %v283 = vadd.f32 %v273, %v278
    %v284 = vadd.f32 %v274, %v278
    %s285 = scalar_lea.vmem %s3, 24
    %v286 = vld [vmem:[%s285] sm:$0xff]
    %v287 = vld [vmem:[%s285 + $0x8] sm:$0xff]
    %v288 = vld [vmem:[%s285 + $0x10] sm:$0xff]
    %v289 = vrot.slane %v281, 7
    %v290 = vrot.slane %v282, 7
    %v291 = vrot.slane %v283, 7
    %v292 = vrot.slane %v284, 7
    %v293 = vsel %vm154, %v291, %v292
    %v294 = vsel %vm154, %v290, %v291
    %v295 = vsel %vm154, %v289, %v290
    %v296 = vsel %vm154, %v292, %v289
    %v297 = vsel %vm129, %v296, 0.0
    %v298 = vsel %vm130, %v295, 0.0
    %v299 = vsel %vm129, %v294, 0.0
    %v300 = vsel %vm130, %v293, 0.0
    %v301 = vrot.slane %v281, 1
    %v302 = vrot.slane %v282, 1
    %v303 = vrot.slane %v283, 1
    %v304 = vrot.slane %v284, 1
    %v305 = vsel %vm167, %v303, %v304
    %v306 = vsel %vm167, %v302, %v303
    %v307 = vsel %vm167, %v301, %v302
    %v308 = vsel %vm167, %v304, %v301
    %v309 = vsel %vm131, %v307, 0.0
    %v310 = vsel %vm132, %v306, 0.0
    %v311 = vsel %vm131, %v305, 0.0
    %v312 = vsel %vm132, %v308, 0.0
    %317 = vrot.lane.b32.xlu0 %v281, 8
    %v318 = vpop.permute.xlu0 %317
    %319 = vrot.lane.b32.xlu0 %v282, 8
    %v320 = vpop.permute.xlu0 %319
    %321 = vrot.lane.b32.xlu0 %v283, 8
    %v322 = vpop.permute.xlu0 %321
    %323 = vrot.lane.b32.xlu0 %v284, 8
    %v324 = vpop.permute.xlu0 %323
    %333 = vrot.lane.b32.xlu0 %v309, 16
    %v334 = vpop.permute.xlu0 %333
    %335 = vrot.lane.b32.xlu0 %v310, 16
    %v336 = vpop.permute.xlu0 %335
    %337 = vrot.lane.b32.xlu0 %v311, 16
    %v338 = vpop.permute.xlu0 %337
    %339 = vrot.lane.b32.xlu0 %v312, 16
    %v340 = vpop.permute.xlu0 %339
    %v345 = vsel %vm208, %v297, %v318
    %v346 = vsel %vm208, %v298, %v320
    %v347 = vsel %vm208, %v299, %v322
    %v348 = vsel %vm208, %v300, %v324
    %v349 = vsel %vm213, %v345, %v334
    %v350 = vsel %vm213, %v346, %v336
    %v351 = vsel %vm213, %v347, %v338
    %v352 = vsel %vm213, %v348, %v340
    %v353 = vperm.slane %v21, 1
    %v355 = vsel %vm219, %v349, 0
    %v358 = vsel %vm219, %v350, 0
    %v361 = vsel %vm219, %v351, 0
    %v364 = vsel %vm219, %v352, 0
    %366 = vmatpush.msra.mxu0 0.0
    %367 = vmatpush.msra.mxu0 0.0
    %368 = vmatpush.msra.mxu0 0.0
    %369 = vmatpush.msra.mxu0 0.0
    %370 = vmatpush.msra.mxu0 0.0
    %371 = vmatpush.msra.mxu0 0.0
    %372 = vmatpush.msra.mxu0 0.0
    %373 = vmatpush.msra.mxu0 0.0
    %374 = vmatpush.msra.mxu0 0.0
    %375 = vmatpush.msra.mxu0 0.0
    %376 = vmatpush.msra.mxu0 0.0
    %377 = vmatpush.msra.mxu0 0.0
    %378 = vmatpush.msra.mxu0 0.0
    %379 = vmatpush.msra.mxu0 %v288
    %380 = vmatpush.msra.mxu0 %v287
    %381 = vmatpush.msra.mxu0 %v286
    %382 = vmatmul.f32.gmra.mxu0 %v355
    %v383 = vpop.f32.mrf.mxu0
    %v384 = vadd.f32 %v353, %v383
    %385 = vmatmul.f32.gmra.mxu0 %v358
    %v386 = vpop.f32.mrf.mxu0
    %v387 = vadd.f32 %v353, %v386
    %388 = vmatmul.f32.gmra.mxu0 %v361
    %v389 = vpop.f32.mrf.mxu0
    %v390 = vadd.f32 %v353, %v389
    %391 = vmatmul.f32.gmra.mxu0 %v364
    %v392 = vpop.f32.mrf.mxu0
    %v393 = vadd.f32 %v353, %v392
    %394 = vdwg.mxu0
    %v395 = vsel %vm208, %v384, 0.0
    %v396 = vsel %vm208, %v387, 0.0
    %v397 = vadd.f32 %v395, %v396
    %v398 = vsel %vm208, %v390, 0.0
    %v399 = vadd.f32 %v397, %v398
    %v400 = vsel %vm208, %v393, 0.0
    %v401 = vadd.f32 %v399, %v400
    %v402 = vrot.slane %v401, 4
    %v403 = vadd.f32 %v401, %v402
    %v404 = vrot.slane %v403, 2
    %v405 = vadd.f32 %v403, %v404
    %v406 = vrot.slane %v405, 1
    %v407 = vadd.f32 %v405, %v406
    %v408 = vmul.f32 %v407, 0.03125
    %v409 = vsub.f32 %v384, %v408
    %v410 = vsub.f32 %v387, %v408
    %v411 = vsub.f32 %v390, %v408
    %v412 = vsub.f32 %v393, %v408
    %v413 = vmul.f32 %v409, %v409
    %v414 = vmul.f32 %v410, %v410
    %v415 = vmul.f32 %v411, %v411
    %v416 = vmul.f32 %v412, %v412
    %v417 = vsel %vm208, %v413, 0.0
    %v418 = vsel %vm208, %v414, 0.0
    %v419 = vadd.f32 %v417, %v418
    %v420 = vsel %vm208, %v415, 0.0
    %v421 = vadd.f32 %v419, %v420
    %v422 = vsel %vm208, %v416, 0.0
    %v423 = vadd.f32 %v421, %v422
    %v424 = vrot.slane %v423, 4
    %v425 = vadd.f32 %v423, %v424
    %v426 = vrot.slane %v425, 2
    %v427 = vadd.f32 %v425, %v426
    %v428 = vrot.slane %v427, 1
    %v429 = vadd.f32 %v427, %v428
    %v430 = vmul.f32 %v429, 0.03125
    %v431 = vadd.f32 %v430, 1e-05
    %v432 = vrsqrt.pop %v431
    %v433 = vmul.f32 %v432, %v431
    %v434 = vmul.f32 %v433, %v432
    %v435 = vmul.f32 0.5, %v434
    %v436 = vsub.f32 1.5, %v435
    %v437 = vmul.f32 %v432, %v436
    %vm438 = vweird.f32 %v431
    %vm439 = vweird.f32 %v432
    %vm440 = vmor %vm438, %vm439
    %v441 = vsel %vm440, %v432, %v437
    %v442 = vmul.f32 %v409, %v441
    %v443 = vmul.f32 %v410, %v441
    %v444 = vmul.f32 %v411, %v441
    %v445 = vmul.f32 %v412, %v441
    %v446 = vperm.slane %v21, 2
    %v447 = vmul.f32 %v442, %v446
    %v448 = vmul.f32 %v443, %v446
    %v449 = vmul.f32 %v444, %v446
    %v450 = vmul.f32 %v445, %v446
    %v451 = vperm.slane %v21, 3
    %v452 = vadd.f32 %v447, %v451
    %v453 = vadd.f32 %v448, %v451
    %v454 = vadd.f32 %v449, %v451
    %v455 = vadd.f32 %v450, %v451
    %v456 = vmax.f32 %v452, 0.0
    %v457 = vmax.f32 %v453, 0.0
    %v458 = vmax.f32 %v454, 0.0
    %v459 = vmax.f32 %v455, 0.0
    %460 = vxpose.xlu0.b32.start [1/16] %v456, 128
    %461 = vxpose.xlu0.b32.cont [2/16] %v457, 128
    %462 = vxpose.xlu0.b32.cont [3/16] 0.0, 128
    %463 = vxpose.xlu0.b32.cont [4/16] 0.0, 128
    %464 = vxpose.xlu0.b32.cont [5/16] 0.0, 128
    %465 = vxpose.xlu0.b32.cont [6/16] 0.0, 128
    %466 = vxpose.xlu0.b32.cont [7/16] 0.0, 128
    %467 = vxpose.xlu0.b32.cont [8/16] 0.0, 128
    %468 = vxpose.xlu0.b32.cont [9/16] 0.0, 128
    %469 = vxpose.xlu0.b32.cont [10/16] 0.0, 128
    %470 = vxpose.xlu0.b32.cont [11/16] 0.0, 128
    %471 = vxpose.xlu0.b32.cont [12/16] 0.0, 128
    %472 = vxpose.xlu0.b32.cont [13/16] 0.0, 128
    %473 = vxpose.xlu0.b32.cont [14/16] 0.0, 128
    %474 = vxpose.xlu0.b32.cont [15/16] 0.0, 128
    %475 = vxpose.xlu0.b32.end [16/16] 0.0, 128
    %v476 = vpop.trf.xlu0
    %v477 = vpop.trf.xlu0
    %v478 = vpop.trf.xlu0
    %v479 = vpop.trf.xlu0
    %v480 = vpop.trf.xlu0
    %v481 = vpop.trf.xlu0
    %v482 = vpop.trf.xlu0
    %v483 = vpop.trf.xlu0
    %v484 = vpop.trf.xlu0
    %v485 = vpop.trf.xlu0
    %v486 = vpop.trf.xlu0
    %v487 = vpop.trf.xlu0
    %v488 = vpop.trf.xlu0
    %v489 = vpop.trf.xlu0
    %v490 = vpop.trf.xlu0
    %v491 = vpop.trf.xlu0
    %492 = vxpose.xlu0.b32.start [1/16] %v458, 128
    %493 = vxpose.xlu0.b32.cont [2/16] %v459, 128
    %494 = vxpose.xlu0.b32.cont [3/16] 0.0, 128
    %495 = vxpose.xlu0.b32.cont [4/16] 0.0, 128
    %496 = vxpose.xlu0.b32.cont [5/16] 0.0, 128
    %497 = vxpose.xlu0.b32.cont [6/16] 0.0, 128
    %498 = vxpose.xlu0.b32.cont [7/16] 0.0, 128
    %499 = vxpose.xlu0.b32.cont [8/16] 0.0, 128
    %500 = vxpose.xlu0.b32.cont [9/16] 0.0, 128
    %501 = vxpose.xlu0.b32.cont [10/16] 0.0, 128
    %502 = vxpose.xlu0.b32.cont [11/16] 0.0, 128
    %503 = vxpose.xlu0.b32.cont [12/16] 0.0, 128
    %504 = vxpose.xlu0.b32.cont [13/16] 0.0, 128
    %505 = vxpose.xlu0.b32.cont [14/16] 0.0, 128
    %506 = vxpose.xlu0.b32.cont [15/16] 0.0, 128
    %507 = vxpose.xlu0.b32.end [16/16] 0.0, 128
    %v508 = vpop.trf.xlu0
    %v509 = vpop.trf.xlu0
    %v510 = vpop.trf.xlu0
    %v511 = vpop.trf.xlu0
    %v512 = vpop.trf.xlu0
    %v513 = vpop.trf.xlu0
    %v514 = vpop.trf.xlu0
    %v515 = vpop.trf.xlu0
    %v516 = vpop.trf.xlu0
    %v517 = vpop.trf.xlu0
    %v518 = vpop.trf.xlu0
    %v519 = vpop.trf.xlu0
    %v520 = vpop.trf.xlu0
    %v521 = vpop.trf.xlu0
    %v522 = vpop.trf.xlu0
    %v523 = vpop.trf.xlu0
    %524 = vst.msk [vmem:[#allocation2] sm:$0xff] %vm213, %v476
    %525 = vst.msk [vmem:[#allocation2 + $0x8] sm:$0xff] %vm213, %v508
    // Predicated region
    $region22: #{tpu_custom_call.1} parent=1 // pred_check
      _
    $region23: #{tpu_custom_call.1} parent=1 // pred_check_branch
      %527 = sbr.rel (0) target = $region25
    $region24: #{tpu_custom_call.1} parent=1 // pred_region
      %529 = vsyncadd [#allocation3], 0
      %s530 = sshll.u32 [#allocation2], 4
      %s531 = int_to_ptr.vmem [resolvable:$true] %s530
      %s532 = sshll.u32 %s5, 4
      %s533 = int_to_ptr.hbm [resolvable:$true] %s532
      %538 = dma.vmem_to_hbm [thread:$0]  %s531, 256, %s533, [#allocation3], 128, 128, 8
    $region25: #{tpu_custom_call.1} parent=1 // pred_fallthru
      _
    // Predicated region
    $region26: #{tpu_custom_call.1} parent=1 // pred_check
      _
    $region27: #{tpu_custom_call.1} parent=1 // pred_check_branch
      %540 = sbr.rel (0) target = $region29
    $region28: #{tpu_custom_call.1} parent=1 // pred_region
      %542 = dma.done [#allocation3], 256
    $region29: #{tpu_custom_call.1} parent=1 // pred_fallthru
      _
    %543 = vsyncpa [#allocation3], 1

</llo_original>
